<compile_context>
chip_gen: v7x
topology: tpu7x:2x2x1
jax: 0.10.0
libtpu: 0.0.40
codegen_flags: <defaults>
</compile_context>

<pallas_src>
import jax
import jax.numpy as jnp
from jax.experimental import pallas as pl
from jax.experimental.pallas import tpu as pltpu

INPUT_DIM = 31 * 18  # 558
H1, H2, H3 = 128, 64, 1
LN_EPS = 1e-5  # PyTorch nn.LayerNorm default


def _pathleaner_kernel(x_ref, w1_ref, cs_ref, b1_ref, w2_ref, b2_ref, w3_ref,
                       b3_ref, o_ref):
    # x_ref: (TB, D) batch tile (any float dtype); stats in f32.
    x = x_ref[...].astype(jnp.float32)

    # LayerNorm statistics, one pass (E[x], E[x^2]).  Clamp guards the mild
    # cancellation of E[x^2]-mean^2; inputs here are feature-scale.
    mean = jnp.mean(x, axis=-1, keepdims=True)                      # (TB, 1)
    ex2 = jnp.mean(x * x, axis=-1, keepdims=True)
    var = jnp.maximum(ex2 - mean * mean, 0.0)
    inv_std = jax.lax.rsqrt(var + LN_EPS)                           # (TB, 1)

    # Linear(558 -> 128) with the LN normalize folded through the matmul:
    #   ((x - mean) * inv_std) @ W1f + b1f
    #     == (x @ W1f - mean * colsum(W1f)) * inv_std + b1f
    # (gamma/beta are already folded into W1f/b1f in the wrapper).
    xw = jnp.dot(x.astype(w1_ref.dtype), w1_ref[...],
                 preferred_element_type=jnp.float32)                # (TB, H1)
    h1 = (xw - mean * cs_ref[...]) * inv_std + b1_ref[...]
    h1 = jnp.maximum(h1, 0.0)

    # Linear(128 -> 64) + ReLU (MXU).
    h2 = jnp.dot(h1, w2_ref[...], preferred_element_type=jnp.float32) + b2_ref[...]
    h2 = jnp.maximum(h2, 0.0)

    # Linear(64 -> 1): VPU multiply + cross-lane reduce (an N=1 MXU matmul
    # wastes the result path).  Result laid out lane-dense as (1, TB).
    s = jnp.sum(h2 * w3_ref[...], axis=-1)                          # (TB,)
    logit = jnp.reshape(s, (1, s.shape[0])) + b3_ref[0]             # (1, TB)
    o_ref[...] = jax.nn.sigmoid(logit).astype(o_ref.dtype)


def _round_up(n, m):
    return (n + m - 1) // m * m


def _chip_class():
    try:
        kind = jax.devices()[0].device_kind.lower()
    except Exception:
        return "other"
    if "v5" in kind:
        return "v5e"
    if "v6" in kind:
        return "v6e"
    if "7" in kind:
        return "v7x"
    return "other"


def _generation_config():
    """(block_b, matmul_dtype, vmem_limit_bytes) per TPU generation."""
    chip = _chip_class()
    if chip == "v5e":
        # 128 MiB physical VMEM but 16 MiB default scoped limit -> raise it.
        # f32 MXU is multi-pass on v5e -> bf16 operands for the big matmul.
        return 1024, jnp.bfloat16, 64 << 20
    if chip == "v6e":
        # HBM-bound; bigger tiles amortize the ~0.35us/step overhead.
        return 2048, jnp.float32, 64 << 20
    if chip == "v7x":
        # 64 MiB VMEM per TC (32 MiB default scoped); modest tiles, and the
        # 2-tile rule below keeps both TensorCores busy.
        return 1024, jnp.float32, 40 << 20
    # Unknown / older chip: stay inside the default scoped VMEM limit.
    return 512, jnp.float32, None


def pathleaner_forward(x, params, *, block_b=None, matmul_dtype=None):
    """x: (B, INPUT_DIM) float32 (or bfloat16).  Returns (B, 1) float32."""
    B, D = x.shape
    assert D == INPUT_DIM
    gamma, beta, w1, b1, w2, b2, w3, b3 = params

    cfg_tb, cfg_mm, vmem_limit = _generation_config()
    if block_b is None:
        block_b = cfg_tb
    if matmul_dtype is None:
        matmul_dtype = cfg_mm

    # Fold the LayerNorm affine into the first Linear (exact math):
    #   (xn*gamma + beta) @ W1 + b1 == xn @ (gamma[:,None]*W1) + (beta@W1 + b1)
    w1f = (w1 * gamma.reshape(D, 1)).astype(matmul_dtype)     # (D, H1)
    # Column sums of the *as-fed-to-the-MXU* weights (for the mean fold).
    cs = jnp.sum(w1f.astype(jnp.float32), axis=0, keepdims=True)   # (1, H1)
    b1f = (beta @ w1 + b1).astype(jnp.float32)                # (1, H1)
    w3r = w3.reshape(1, H2).astype(jnp.float32)               # (1, 64)
    b3s = b3.reshape(-1).astype(jnp.float32)                  # (1,) scalar, SMEM

    # Tile-size selection.
    tb = block_b
    if B >= 256:
        # Guarantee >= 2 (balanced) tiles so the "parallel" grid axis actually
        # feeds both TensorCores on v7x; near-free on single-TC chips.
        tb = min(tb, _round_up(-(-B // 2), 128))
    if B < tb:
        tb = _round_up(max(B, 1), 8)      # single tile; pad batch to x8
    b_pad = _round_up(B, tb)
    if b_pad != B:
        x = jnp.pad(x, ((0, b_pad - B), (0, 0)))   # zero rows are LN-safe
    n_tiles = b_pad // tb

    const = lambda shape: pl.BlockSpec(shape, lambda i: (0, 0))

    out = pl.pallas_call(
        _pathleaner_kernel,
        out_shape=jax.ShapeDtypeStruct((1, b_pad), jnp.float32),
        grid_spec=pltpu.PrefetchScalarGridSpec(
            num_scalar_prefetch=0,
            grid=(n_tiles,),
            in_specs=[
                pl.BlockSpec((tb, D), lambda i: (i, 0)),   # streamed batch tile
                const((D, H1)),                            # W1 (gamma folded)
                const((1, H1)),                            # colsum(W1f)
                const((1, H1)),                            # b1 (beta folded)
                const((H1, H2)),                           # W2
                const((1, H2)),                            # b2
                const((1, H2)),                            # W3 as a row
                pl.BlockSpec(memory_space=pltpu.MemorySpace.SMEM),  # b3 scalar
            ],
            out_specs=pl.BlockSpec((1, tb), lambda i: (0, i)),  # lane-dense
        ),
        compiler_params=pltpu.CompilerParams(
            dimension_semantics=("parallel",),
            vmem_limit_bytes=vmem_limit),
    )(x, w1f, cs, b1f, w2, b2, w3r, b3s)

    return out[0, :B].reshape(B, 1)


def init_params(key):
    """Parameters mirroring the PyTorch module.

    Linear weights use xavier-normal (as in weight_init); biases zero;
    LayerNorm gamma=1, beta=0.  Linear weights are stored pre-transposed as
    (in_features, out_features).
    """
    k1, k2, k3 = jax.random.split(key, 3)

    def xavier_normal(k, fan_in, fan_out):
        std = (2.0 / (fan_in + fan_out)) ** 0.5
        w = jax.random.normal(k, (fan_out, fan_in), dtype=jnp.float32) * std
        return jnp.transpose(w)

    gamma = jnp.ones((1, INPUT_DIM), jnp.float32)
    beta = jnp.zeros((1, INPUT_DIM), jnp.float32)
    w1 = xavier_normal(k1, INPUT_DIM, H1)
    b1 = jnp.zeros((1, H1), jnp.float32)
    w2 = xavier_normal(k2, H1, H2)
    b2 = jnp.zeros((1, H2), jnp.float32)
    w3 = xavier_normal(k3, H2, H3)
    b3 = jnp.zeros((1, H3), jnp.float32)
    return (gamma, beta, w1, b1, w2, b2, w3, b3)


def reference_forward(x, params):
    gamma, beta, w1, b1, w2, b2, w3, b3 = params
    mean = jnp.mean(x, axis=-1, keepdims=True)
    var = jnp.mean((x - mean) ** 2, axis=-1, keepdims=True)
    xn = (x - mean) * jax.lax.rsqrt(var + LN_EPS) * gamma + beta
    h1 = jnp.maximum(xn @ w1 + b1, 0.0)
    h2 = jnp.maximum(h1 @ w2 + b2, 0.0)
    return jax.nn.sigmoid(h2 @ w3 + b3)


if __name__ == "__main__":
    key = jax.random.PRNGKey(0)
    kx, kx2, kp, kg, kb = jax.random.split(key, 5)

    params = init_params(kp)
    # Perturb gamma/beta away from the (1, 0) defaults so the gamma/beta ->
    # W1/b1 folding path is genuinely exercised.
    gamma = 1.0 + 0.1 * jax.random.normal(kg, (1, INPUT_DIM), jnp.float32)
    beta = 0.1 * jax.random.normal(kb, (1, INPUT_DIM), jnp.float32)
    params = (gamma, beta) + params[2:]

    # Small batch, exact-f32 matmul path: tight tolerance vs reference.
    B = 8
    x = jax.random.normal(kx, (B, INPUT_DIM), dtype=jnp.float32)
    out = jax.block_until_ready(
        pathleaner_forward(x, params, matmul_dtype=jnp.float32))
    ref = reference_forward(x, params)
    assert out.shape == (B, 1)
    assert jnp.allclose(out, ref, atol=1e-4, rtol=1e-4), (out, ref)

    # Auto per-generation config (may use bf16 MXU operands on v5e): looser
    # tolerance, and a larger batch to exercise the multi-tile pipelined /
    # megacore-balanced grid path.
    B2 = 512
    x2 = jax.random.normal(kx2, (B2, INPUT_DIM), dtype=jnp.float32)
    out2 = jax.block_until_ready(pathleaner_forward(x2, params))
    ref2 = reference_forward(x2, params)
    assert out2.shape == (B2, 1)
    assert jnp.allclose(out2, ref2, atol=5e-3, rtol=5e-3)

    print("KERNEL_OK")
</pallas_src>

<mosaic_0001>
module attributes {stable_mosaic.version = 11 : i64} {
  func.func @_pathleaner_kernel(%arg0: i32, %arg1: memref<8x558xf32, #tpu.memory_space<vmem>>, %arg2: memref<558x128xf32, #tpu.memory_space<vmem>>, %arg3: memref<1x128xf32, #tpu.memory_space<vmem>>, %arg4: memref<1x128xf32, #tpu.memory_space<vmem>>, %arg5: memref<128x64xf32, #tpu.memory_space<vmem>>, %arg6: memref<1x64xf32, #tpu.memory_space<vmem>>, %arg7: memref<1x64xf32, #tpu.memory_space<vmem>>, %arg8: memref<1xf32, #tpu.memory_space<smem>>, %arg9: memref<1x8xf32, #tpu.memory_space<vmem>>) attributes {dimension_semantics = [#tpu.dimension_semantics<parallel>], iteration_bounds = array<i64: 1>, scalar_prefetch = 0 : i64, scratch_operands = 0 : i64, tpu.core_type = #tpu.core_type<tc>, window_params = [{transform_indices = @transform_0, window_bounds = array<i64: 8, 558>}, {pipeline_mode = #tpu.pipeline_mode<synchronous>, transform_indices = @transform_1, window_bounds = array<i64: 558, 128>}, {pipeline_mode = #tpu.pipeline_mode<synchronous>, transform_indices = @transform_2, window_bounds = array<i64: 1, 128>}, {pipeline_mode = #tpu.pipeline_mode<synchronous>, transform_indices = @transform_3, window_bounds = array<i64: 1, 128>}, {pipeline_mode = #tpu.pipeline_mode<synchronous>, transform_indices = @transform_4, window_bounds = array<i64: 128, 64>}, {pipeline_mode = #tpu.pipeline_mode<synchronous>, transform_indices = @transform_5, window_bounds = array<i64: 1, 64>}, {pipeline_mode = #tpu.pipeline_mode<synchronous>, transform_indices = @transform_6, window_bounds = array<i64: 1, 64>}, {transform_indices = @transform_7, window_bounds = array<i64: 1>}, {transform_indices = @transform_8, window_bounds = array<i64: 1, 8>}]} {
    %c0 = arith.constant 0 : index
    %c0_0 = arith.constant 0 : index
    %0 = vector.load %arg1[%c0, %c0_0] : memref<8x558xf32, #tpu.memory_space<vmem>>, vector<8x558xf32>
    %cst = arith.constant dense<0.000000e+00> : vector<8xf32>
    %1 = vector.multi_reduction <add>, %0, %cst [1] : vector<8x558xf32> to vector<8xf32>
    %2 = vector.shape_cast %1 : vector<8xf32> to vector<8x1xf32>
    %cst_1 = arith.constant 5.580000e+02 : f32
    %3 = vector.broadcast %cst_1 : f32 to vector<8x1xf32>
    %4 = arith.divf %2, %3 : vector<8x1xf32>
    %5 = arith.mulf %0, %0 : vector<8x558xf32>
    %cst_2 = arith.constant dense<0.000000e+00> : vector<8xf32>
    %6 = vector.multi_reduction <add>, %5, %cst_2 [1] : vector<8x558xf32> to vector<8xf32>
    %7 = vector.shape_cast %6 : vector<8xf32> to vector<8x1xf32>
    %cst_3 = arith.constant 5.580000e+02 : f32
    %8 = vector.broadcast %cst_3 : f32 to vector<8x1xf32>
    %9 = arith.divf %7, %8 : vector<8x1xf32>
    %10 = arith.mulf %4, %4 : vector<8x1xf32>
    %11 = arith.subf %9, %10 : vector<8x1xf32>
    %cst_4 = arith.constant 0.000000e+00 : f32
    %12 = vector.broadcast %cst_4 : f32 to vector<8x1xf32>
    %13 = arith.maximumf %11, %12 : vector<8x1xf32>
    %cst_5 = arith.constant 9.99999974E-6 : f32
    %14 = vector.broadcast %cst_5 : f32 to vector<8x1xf32>
    %15 = arith.addf %13, %14 : vector<8x1xf32>
    %16 = math.rsqrt %15 : vector<8x1xf32>
    %c0_6 = arith.constant 0 : index
    %c0_7 = arith.constant 0 : index
    %17 = vector.load %arg2[%c0_6, %c0_7] : memref<558x128xf32, #tpu.memory_space<vmem>>, vector<558x128xf32>
    %cst_8 = arith.constant dense<0.000000e+00> : vector<8x128xf32>
    %18 = tpu.matmul %0, %17, %cst_8 {dimension_numbers = #tpu.dot_dimension_numbers<[1], [0], [0], [1], [0, 0, 1, 1], [], []>} : vector<8x558xf32>, vector<558x128xf32>, vector<8x128xf32> -> vector<8x128xf32>
    %c0_9 = arith.constant 0 : index
    %c0_10 = arith.constant 0 : index
    %19 = vector.load %arg3[%c0_9, %c0_10] : memref<1x128xf32, #tpu.memory_space<vmem>>, vector<1x128xf32>
    %20 = vector.broadcast %4 : vector<8x1xf32> to vector<8x128xf32>
    %21 = vector.broadcast %19 : vector<1x128xf32> to vector<8x128xf32>
    %22 = arith.mulf %20, %21 : vector<8x128xf32>
    %23 = arith.subf %18, %22 : vector<8x128xf32>
    %24 = vector.broadcast %16 : vector<8x1xf32> to vector<8x128xf32>
    %25 = arith.mulf %23, %24 : vector<8x128xf32>
    %c0_11 = arith.constant 0 : index
    %c0_12 = arith.constant 0 : index
    %26 = vector.load %arg4[%c0_11, %c0_12] : memref<1x128xf32, #tpu.memory_space<vmem>>, vector<1x128xf32>
    %27 = vector.broadcast %26 : vector<1x128xf32> to vector<8x128xf32>
    %28 = arith.addf %25, %27 : vector<8x128xf32>
    %cst_13 = arith.constant 0.000000e+00 : f32
    %29 = vector.broadcast %cst_13 : f32 to vector<8x128xf32>
    %30 = arith.maximumf %28, %29 : vector<8x128xf32>
    %c0_14 = arith.constant 0 : index
    %c0_15 = arith.constant 0 : index
    %31 = vector.load %arg5[%c0_14, %c0_15] : memref<128x64xf32, #tpu.memory_space<vmem>>, vector<128x64xf32>
    %cst_16 = arith.constant dense<0.000000e+00> : vector<8x64xf32>
    %32 = tpu.matmul %30, %31, %cst_16 {dimension_numbers = #tpu.dot_dimension_numbers<[1], [0], [0], [1], [0, 0, 1, 1], [], []>} : vector<8x128xf32>, vector<128x64xf32>, vector<8x64xf32> -> vector<8x64xf32>
    %c0_17 = arith.constant 0 : index
    %c0_18 = arith.constant 0 : index
    %33 = vector.load %arg6[%c0_17, %c0_18] : memref<1x64xf32, #tpu.memory_space<vmem>>, vector<1x64xf32>
    %34 = vector.broadcast %33 : vector<1x64xf32> to vector<8x64xf32>
    %35 = arith.addf %32, %34 : vector<8x64xf32>
    %cst_19 = arith.constant 0.000000e+00 : f32
    %36 = vector.broadcast %cst_19 : f32 to vector<8x64xf32>
    %37 = arith.maximumf %35, %36 : vector<8x64xf32>
    %c0_20 = arith.constant 0 : index
    %c0_21 = arith.constant 0 : index
    %38 = vector.load %arg7[%c0_20, %c0_21] : memref<1x64xf32, #tpu.memory_space<vmem>>, vector<1x64xf32>
    %39 = vector.broadcast %38 : vector<1x64xf32> to vector<8x64xf32>
    %40 = arith.mulf %37, %39 : vector<8x64xf32>
    %cst_22 = arith.constant dense<0.000000e+00> : vector<8xf32>
    %41 = vector.multi_reduction <add>, %40, %cst_22 [1] : vector<8x64xf32> to vector<8xf32>
    %42 = vector.shape_cast %41 : vector<8xf32> to vector<1x8xf32>
    %c0_23 = arith.constant 0 : index
    %43 = memref.load %arg8[%c0_23] : memref<1xf32, #tpu.memory_space<smem>>
    %44 = vector.broadcast %43 : f32 to vector<1x8xf32>
    %45 = arith.addf %42, %44 : vector<1x8xf32>
    %46 = arith.negf %45 : vector<1x8xf32>
    %47 = math.exp %46 : vector<1x8xf32>
    %cst_24 = arith.constant 1.000000e+00 : f32
    %48 = vector.broadcast %cst_24 : f32 to vector<1x8xf32>
    %49 = arith.addf %48, %47 : vector<1x8xf32>
    %50 = arith.divf %48, %49 : vector<1x8xf32>
    %c0_25 = arith.constant 0 : index
    %c0_26 = arith.constant 0 : index
    %51 = vector.load %arg9[%c0_25, %c0_26] : memref<1x8xf32, #tpu.memory_space<vmem>>, vector<1x8xf32>
    tpu.vector_store %arg9[%c0_25, %c0_26], %50 {strides = array<i32>} : memref<1x8xf32, #tpu.memory_space<vmem>>, vector<1x8xf32>,
    return
  }
  func.func @transform_0(%arg0: i32) -> (i32, i32) {
    %c0_i32 = arith.constant 0 : i32
    %c0_i32_0 = arith.constant 0 : i32
    return %arg0, %c0_i32 : i32, i32
  }
  func.func @transform_1(%arg0: i32) -> (i32, i32) {
    %c0_i32 = arith.constant 0 : i32
    %c0_i32_0 = arith.constant 0 : i32
    %c0_i32_1 = arith.constant 0 : i32
    return %c0_i32, %c0_i32_0 : i32, i32
  }
  func.func @transform_2(%arg0: i32) -> (i32, i32) {
    %c0_i32 = arith.constant 0 : i32
    %c0_i32_0 = arith.constant 0 : i32
    %c0_i32_1 = arith.constant 0 : i32
    return %c0_i32, %c0_i32_0 : i32, i32
  }
  func.func @transform_3(%arg0: i32) -> (i32, i32) {
    %c0_i32 = arith.constant 0 : i32
    %c0_i32_0 = arith.constant 0 : i32
    %c0_i32_1 = arith.constant 0 : i32
    return %c0_i32, %c0_i32_0 : i32, i32
  }
  func.func @transform_4(%arg0: i32) -> (i32, i32) {
    %c0_i32 = arith.constant 0 : i32
    %c0_i32_0 = arith.constant 0 : i32
    %c0_i32_1 = arith.constant 0 : i32
    return %c0_i32, %c0_i32_0 : i32, i32
  }
  func.func @transform_5(%arg0: i32) -> (i32, i32) {
    %c0_i32 = arith.constant 0 : i32
    %c0_i32_0 = arith.constant 0 : i32
    %c0_i32_1 = arith.constant 0 : i32
    return %c0_i32, %c0_i32_0 : i32, i32
  }
  func.func @transform_6(%arg0: i32) -> (i32, i32) {
    %c0_i32 = arith.constant 0 : i32
    %c0_i32_0 = arith.constant 0 : i32
    %c0_i32_1 = arith.constant 0 : i32
    return %c0_i32, %c0_i32_0 : i32, i32
  }
  func.func @transform_7(%arg0: i32) -> i32 {
    %c0_i32 = arith.constant 0 : i32
    %c0_i32_0 = arith.constant 0 : i32
    return %c0_i32 : i32
  }
  func.func @transform_8(%arg0: i32) -> (i32, i32) {
    %c0_i32 = arith.constant 0 : i32
    %c0_i32_0 = arith.constant 0 : i32
    return %c0_i32, %arg0 : i32, i32
  }
}

</mosaic_0001>

<llo_original>
// kernel: tpu_custom_call.1
$region0: #{tpu_custom_call.1}
  #allocation0 [shape = 'u32[]', space=smem, size = 0x4, offset = 0x4, fixed_abs, tag = 'smem constant byte address 0x4 - core index']
  #allocation1 [shape = 'u32[144,128]{1,0:T(1,128)}', space=vmem, size = 0x12000, scoped, tag = 'internal scratch']
  #allocation2 [shape = 'f32[1]{0:T(128)S(6)}', space=smem, size = 0x200, scoped, tag = 'scoped memory for tpu_custom_call.1']
  %s0 = inlined_call_operand.vmem [shape: f32[8,558], index: 0, kind: input, shape index: {}]
  %s1 = inlined_call_operand.hbm [shape: f32[558,128], index: 1, kind: input, shape index: {}]
  %s2 = inlined_call_operand.vmem [shape: f32[1,128], index: 2, kind: input, shape index: {}]
  %s3 = inlined_call_operand.vmem [shape: f32[1,128], index: 3, kind: input, shape index: {}]
  %s4 = inlined_call_operand.vmem [shape: f32[128,64], index: 4, kind: input, shape index: {}]
  %s5 = inlined_call_operand.vmem [shape: f32[1,64], index: 5, kind: input, shape index: {}]
  %s6 = inlined_call_operand.vmem [shape: f32[1,64], index: 6, kind: input, shape index: {}]
  %s7 = inlined_call_operand.<no memory space> [shape: f32[1], index: 7, kind: input, shape index: {}]
  %s8 = inlined_call_operand.hbm [shape: f32[1,8], index: 8, kind: output, shape index: {}]
  %s9 = sld [smem:[#allocation0]]
  $region46: #{tpu_custom_call.1} parent=0
    _
  %s11 = ssub.s32 1, %s9
  %s12 = scalar_select 0, %s11, %s9
  %13 = sst [smem:[#allocation2]] %s7
  $region1: #{tpu_custom_call.1} parent=0
    #allocation3 [shape = 'u8[286720]{0}', space=vmem, size = 0x46000, scoped, tag = 'input window, operand 1, single buffered']
    #allocation4 [shape = 's32[1]{0}', space=sflag, size = 0x4, scoped, tag = 'scoped memory for tpu_custom_call.1']
    #allocation5 [shape = 's32[1]{0}', space=sflag, size = 0x4, scoped, tag = 'scoped memory for tpu_custom_call.1']
    #allocation6 [shape = 'u8[512]{0}', space=vmem, size = 0x400, scoped, tag = 'output window, operand 0, single buffered']
    %14 = vsyncpa [#allocation4], 0
    %15 = vsyncpa [#allocation5], 0
    // Predicated region
    $region2: #{tpu_custom_call.1} parent=1 // pred_check
      _
    $region3: #{tpu_custom_call.1} parent=1 // pred_check_branch
      %17 = sbr.rel (0) target = $region5
    $region4: #{tpu_custom_call.1} parent=1 // pred_region
      _
    $region5: #{tpu_custom_call.1} parent=1 // pred_fallthru
      _
    // Predicated region
    $region6: #{tpu_custom_call.1} parent=1 // pred_check
      _
    $region7: #{tpu_custom_call.1} parent=1 // pred_check_branch
      %19 = sbr.rel (0) target = $region9
    $region8: #{tpu_custom_call.1} parent=1 // pred_region
      %s21 = ssub.s32 8960, 8960
      %22 = vsyncadd [#allocation4], %s21
      %s23 = sshll.u32 [#allocation3], 4
      %s24 = int_to_ptr.vmem [resolvable:$true] %s23
      %29 = dma.hbm_to_vmem [thread:$0]  %s1, 8960, %s24, [#allocation4], 128, 128, 8
    $region9: #{tpu_custom_call.1} parent=1 // pred_fallthru
      _
    // Predicated region
    $region10: #{tpu_custom_call.1} parent=1 // pred_check
      _
    $region11: #{tpu_custom_call.1} parent=1 // pred_check_branch
      %31 = sbr.rel (0) target = $region13
    $region12: #{tpu_custom_call.1} parent=1 // pred_region
      _
    $region13: #{tpu_custom_call.1} parent=1 // pred_fallthru
      _
    // Predicated region
    $region14: #{tpu_custom_call.1} parent=1 // pred_check
      _
    $region15: #{tpu_custom_call.1} parent=1 // pred_check_branch
      %33 = sbr.rel (0) target = $region17
    $region16: #{tpu_custom_call.1} parent=1 // pred_region
      _
    $region17: #{tpu_custom_call.1} parent=1 // pred_fallthru
      _
    // Predicated region
    $region18: #{tpu_custom_call.1} parent=1 // pred_check
      _
    $region19: #{tpu_custom_call.1} parent=1 // pred_check_branch
      %35 = sbr.rel (0) target = $region21
    $region20: #{tpu_custom_call.1} parent=1 // pred_region
      _
    $region21: #{tpu_custom_call.1} parent=1 // pred_fallthru
      _
    // Predicated region
    $region22: #{tpu_custom_call.1} parent=1 // pred_check
      _
    $region23: #{tpu_custom_call.1} parent=1 // pred_check_branch
      %37 = sbr.rel (0) target = $region25
    $region24: #{tpu_custom_call.1} parent=1 // pred_region
      _
    $region25: #{tpu_custom_call.1} parent=1 // pred_fallthru
      _
    // Predicated region
    $region26: #{tpu_custom_call.1} parent=1 // pred_check
      _
    $region27: #{tpu_custom_call.1} parent=1 // pred_check_branch
      %39 = sbr.rel (0) target = $region29
    $region28: #{tpu_custom_call.1} parent=1 // pred_region
      _
    $region29: #{tpu_custom_call.1} parent=1 // pred_fallthru
      _
    // Predicated region
    $region30: #{tpu_custom_call.1} parent=1 // pred_check
      _
    $region31: #{tpu_custom_call.1} parent=1 // pred_check_branch
      %41 = sbr.rel (0) target = $region33
    $region32: #{tpu_custom_call.1} parent=1 // pred_region
      _
    $region33: #{tpu_custom_call.1} parent=1 // pred_fallthru
      _
    // Predicated region
    $region34: #{tpu_custom_call.1} parent=1 // pred_check
      _
    $region35: #{tpu_custom_call.1} parent=1 // pred_check_branch
      %43 = sbr.rel (0) target = $region37
    $region36: #{tpu_custom_call.1} parent=1 // pred_region
      %44 = dma.done [#allocation4], 8960
    $region37: #{tpu_custom_call.1} parent=1 // pred_fallthru
      _
    %v45 = vld [vmem:[%s0] sm:$0xff]
    %v46 = vld [vmem:[%s0 + $0x8] sm:$0xff]
    %v47 = vld [vmem:[%s0 + $0x10] sm:$0xff]
    %v48 = vld [vmem:[%s0 + $0x18] sm:$0xff]
    %v49 = vld [vmem:[%s0 + $0x20] sm:$0xff]
    %v50 = vadd.f32 %v45, %v46
    %v51 = vadd.f32 %v50, %v47
    %v52 = vadd.f32 %v51, %v48
    %vm53 = vcmask 375808
    %v54 = vsel %vm53, %v49, 0.0
    %v55 = vadd.f32 %v52, %v54
    %56 = vadd.xlane.f32.xlu0 %v55
    %v57 = vpop.xlane.xlu0 %56
    %v58 = vrcp.pop 558.0
    %v59 = vmul.f32 %v57, %v58
    %v60 = vmul.f32 %v45, %v45
    %v61 = vmul.f32 %v46, %v46
    %v62 = vmul.f32 %v47, %v47
    %v63 = vmul.f32 %v48, %v48
    %v64 = vmul.f32 %v49, %v49
    %v65 = vadd.f32 %v60, %v61
    %v66 = vadd.f32 %v65, %v62
    %v67 = vadd.f32 %v66, %v63
    %v68 = vsel %vm53, %v64, 0.0
    %v69 = vadd.f32 %v67, %v68
    %70 = vadd.xlane.f32.xlu0 %v69
    %v71 = vpop.xlane.xlu0 %70
    %v72 = vmul.f32 %v71, %v58
    %v73 = vmul.f32 %v59, %v59
    %v74 = vsub.f32 %v72, %v73
    %v75 = vmax.f32 %v74, 0.0
    %v76 = vadd.f32 %v75, 1e-05
    %v77 = vrsqrt.pop %v76
    %v78 = vld [vmem:[#allocation3] sm:$0xff]
    %v79 = vld [vmem:[#allocation3 + $0x8] sm:$0xff]
    %v80 = vld [vmem:[#allocation3 + $0x10] sm:$0xff]
    %v81 = vld [vmem:[#allocation3 + $0x18] sm:$0xff]
    %v82 = vld [vmem:[#allocation3 + $0x20] sm:$0xff]
    %v83 = vld [vmem:[#allocation3 + $0x28] sm:$0xff]
    %v84 = vld [vmem:[#allocation3 + $0x30] sm:$0xff]
    %v85 = vld [vmem:[#allocation3 + $0x38] sm:$0xff]
    %v86 = vld [vmem:[#allocation3 + $0x40] sm:$0xff]
    %v87 = vld [vmem:[#allocation3 + $0x48] sm:$0xff]
    %v88 = vld [vmem:[#allocation3 + $0x50] sm:$0xff]
    %v89 = vld [vmem:[#allocation3 + $0x58] sm:$0xff]
    %v90 = vld [vmem:[#allocation3 + $0x60] sm:$0xff]
    %v91 = vld [vmem:[#allocation3 + $0x68] sm:$0xff]
    %v92 = vld [vmem:[#allocation3 + $0x70] sm:$0xff]
    %v93 = vld [vmem:[#allocation3 + $0x78] sm:$0xff]
    %v94 = vld [vmem:[#allocation3 + $0x80] sm:$0xff]
    %v95 = vld [vmem:[#allocation3 + $0x88] sm:$0xff]
    %v96 = vld [vmem:[#allocation3 + $0x90] sm:$0xff]
    %v97 = vld [vmem:[#allocation3 + $0x98] sm:$0xff]
    %v98 = vld [vmem:[#allocation3 + $0xa0] sm:$0xff]
    %v99 = vld [vmem:[#allocation3 + $0xa8] sm:$0xff]
    %v100 = vld [vmem:[#allocation3 + $0xb0] sm:$0xff]
    %v101 = vld [vmem:[#allocation3 + $0xb8] sm:$0xff]
    %v102 = vld [vmem:[#allocation3 + $0xc0] sm:$0xff]
    %v103 = vld [vmem:[#allocation3 + $0xc8] sm:$0xff]
    %v104 = vld [vmem:[#allocation3 + $0xd0] sm:$0xff]
    %v105 = vld [vmem:[#allocation3 + $0xd8] sm:$0xff]
    %v106 = vld [vmem:[#allocation3 + $0xe0] sm:$0xff]
    %v107 = vld [vmem:[#allocation3 + $0xe8] sm:$0xff]
    %v108 = vld [vmem:[#allocation3 + $0xf0] sm:$0xff]
    %v109 = vld [vmem:[#allocation3 + $0xf8] sm:$0xff]
    %v110 = vld [vmem:[#allocation3 + $0x100] sm:$0xff]
    %v111 = vld [vmem:[#allocation3 + $0x108] sm:$0xff]
    %v112 = vld [vmem:[#allocation3 + $0x110] sm:$0xff]
    %v113 = vld [vmem:[#allocation3 + $0x118] sm:$0xff]
    %v114 = vld [vmem:[#allocation3 + $0x120] sm:$0xff]
    %v115 = vld [vmem:[#allocation3 + $0x128] sm:$0xff]
    %v116 = vld [vmem:[#allocation3 + $0x130] sm:$0xff]
    %v117 = vld [vmem:[#allocation3 + $0x138] sm:$0xff]
    %v118 = vld [vmem:[#allocation3 + $0x140] sm:$0xff]
    %v119 = vld [vmem:[#allocation3 + $0x148] sm:$0xff]
    %v120 = vld [vmem:[#allocation3 + $0x150] sm:$0xff]
    %v121 = vld [vmem:[#allocation3 + $0x158] sm:$0xff]
    %v122 = vld [vmem:[#allocation3 + $0x160] sm:$0xff]
    %v123 = vld [vmem:[#allocation3 + $0x168] sm:$0xff]
    %v124 = vld [vmem:[#allocation3 + $0x170] sm:$0xff]
    %v125 = vld [vmem:[#allocation3 + $0x178] sm:$0xff]
    %v126 = vld [vmem:[#allocation3 + $0x180] sm:$0xff]
    %v127 = vld [vmem:[#allocation3 + $0x188] sm:$0xff]
    %v128 = vld [vmem:[#allocation3 + $0x190] sm:$0xff]
    %v129 = vld [vmem:[#allocation3 + $0x198] sm:$0xff]
    %v130 = vld [vmem:[#allocation3 + $0x1a0] sm:$0xff]
    %v131 = vld [vmem:[#allocation3 + $0x1a8] sm:$0xff]
    %v132 = vld [vmem:[#allocation3 + $0x1b0] sm:$0xff]
    %v133 = vld [vmem:[#allocation3 + $0x1b8] sm:$0xff]
    %v134 = vld [vmem:[#allocation3 + $0x1c0] sm:$0xff]
    %v135 = vld [vmem:[#allocation3 + $0x1c8] sm:$0xff]
    %v136 = vld [vmem:[#allocation3 + $0x1d0] sm:$0xff]
    %v137 = vld [vmem:[#allocation3 + $0x1d8] sm:$0xff]
    %v138 = vld [vmem:[#allocation3 + $0x1e0] sm:$0xff]
    %v139 = vld [vmem:[#allocation3 + $0x1e8] sm:$0xff]
    %v140 = vld [vmem:[#allocation3 + $0x1f0] sm:$0xff]
    %v141 = vld [vmem:[#allocation3 + $0x1f8] sm:$0xff]
    %v142 = vld [vmem:[#allocation3 + $0x200] sm:$0xff]
    %v143 = vld [vmem:[#allocation3 + $0x208] sm:$0xff]
    %v144 = vld [vmem:[#allocation3 + $0x210] sm:$0xff]
    %v145 = vld [vmem:[#allocation3 + $0x218] sm:$0xff]
    %v146 = vld [vmem:[#allocation3 + $0x220] sm:$0xff]
    %v147 = vld [vmem:[#allocation3 + $0x228] sm:$0x3f]
    %v149 = vsel %vm53, %v49, 0
    %vm151 = vcmask 1045504
    %v153 = vsel %vm151, %v147, 0
    %155 = vmatprep.subr.mxu0 0.0
    %156 = vmatpush1.msra.mxu0 %v78
    %157 = vmatprep.subr.mxu0 0.0
    %158 = vmatpush1.msra.mxu0 %v79
    %159 = vmatprep.subr.mxu0 0.0
    %160 = vmatpush1.msra.mxu0 %v80
    %161 = vmatprep.subr.mxu0 0.0
    %162 = vmatpush1.msra.mxu0 %v81
    %163 = vmatprep.subr.mxu0 0.0
    %164 = vmatpush1.msra.mxu0 %v82
    %165 = vmatprep.subr.mxu0 0.0
    %166 = vmatpush1.msra.mxu0 %v83
    %167 = vmatprep.subr.mxu0 0.0
    %168 = vmatpush1.msra.mxu0 %v84
    %169 = vmatprep.subr.mxu0 0.0
    %170 = vmatpush1.msra.mxu0 %v85
    %171 = vmatprep.subr.mxu0 0.0
    %172 = vmatpush1.msra.mxu0 %v86
    %173 = vmatprep.subr.mxu0 0.0
    %174 = vmatpush1.msra.mxu0 %v87
    %175 = vmatprep.subr.mxu0 0.0
    %176 = vmatpush1.msra.mxu0 %v88
    %177 = vmatprep.subr.mxu0 0.0
    %178 = vmatpush1.msra.mxu0 %v89
    %179 = vmatprep.subr.mxu0 0.0
    %180 = vmatpush1.msra.mxu0 %v90
    %181 = vmatprep.subr.mxu0 0.0
    %182 = vmatpush1.msra.mxu0 %v91
    %183 = vmatprep.subr.mxu0 0.0
    %184 = vmatpush1.msra.mxu0 %v92
    %185 = vmatprep.subr.mxu0 0.0
    %186 = vmatpush1.msra.mxu0 %v93
    %187 = vmatprep.subr.mxu0 0.0
    %188 = vmatpush1.msra.mxu0 %v94
    %189 = vmatprep.subr.mxu0 0.0
    %190 = vmatpush1.msra.mxu0 %v95
    %191 = vmatprep.subr.mxu0 0.0
    %192 = vmatpush1.msra.mxu0 %v96
    %193 = vmatprep.subr.mxu0 0.0
    %194 = vmatpush1.msra.mxu0 %v97
    %195 = vmatprep.subr.mxu0 0.0
    %196 = vmatpush1.msra.mxu0 %v98
    %197 = vmatprep.subr.mxu0 0.0
    %198 = vmatpush1.msra.mxu0 %v99
    %199 = vmatprep.subr.mxu0 0.0
    %200 = vmatpush1.msra.mxu0 %v100
    %201 = vmatprep.subr.mxu0 0.0
    %202 = vmatpush1.msra.mxu0 %v101
    %203 = vmatprep.subr.mxu0 0.0
    %204 = vmatpush1.msra.mxu0 %v102
    %205 = vmatprep.subr.mxu0 0.0
    %206 = vmatpush1.msra.mxu0 %v103
    %207 = vmatprep.subr.mxu0 0.0
    %208 = vmatpush1.msra.mxu0 %v104
    %209 = vmatprep.subr.mxu0 0.0
    %210 = vmatpush1.msra.mxu0 %v105
    %211 = vmatprep.subr.mxu0 0.0
    %212 = vmatpush1.msra.mxu0 %v106
    %213 = vmatprep.subr.mxu0 0.0
    %214 = vmatpush1.msra.mxu0 %v107
    %215 = vmatprep.subr.mxu0 0.0
    %216 = vmatpush1.msra.mxu0 %v108
    %217 = vmatprep.subr.mxu0 0.0
    %218 = vmatpush1.msra.mxu0 %v109
    %219 = vmatprep.mubr.f32.mxu0 %v46
    %220 = vmatmul.mubr.f32.gmra.mrb[0].mxu0 %v45
    %v221 = vpop.f32.mrb[0].mxu0
    %v222 = vadd.f32 0.0, %v221
    %v223 = vpop.f32.mrb[0].mxu0
    %224 = vdwg.mxu0
    %225 = vmatprep.subr.mxu0 0.0
    %226 = vmatpush1.msra.mxu0 %v110
    %227 = vmatprep.subr.mxu0 0.0
    %228 = vmatpush1.msra.mxu0 %v111
    %229 = vmatprep.subr.mxu0 0.0
    %230 = vmatpush1.msra.mxu0 %v112
    %231 = vmatprep.subr.mxu0 0.0
    %232 = vmatpush1.msra.mxu0 %v113
    %233 = vmatprep.subr.mxu0 0.0
    %234 = vmatpush1.msra.mxu0 %v114
    %235 = vmatprep.subr.mxu0 0.0
    %236 = vmatpush1.msra.mxu0 %v115
    %237 = vmatprep.subr.mxu0 0.0
    %238 = vmatpush1.msra.mxu0 %v116
    %239 = vmatprep.subr.mxu0 0.0
    %240 = vmatpush1.msra.mxu0 %v117
    %241 = vmatprep.subr.mxu0 0.0
    %242 = vmatpush1.msra.mxu0 %v118
    %243 = vmatprep.subr.mxu0 0.0
    %244 = vmatpush1.msra.mxu0 %v119
    %245 = vmatprep.subr.mxu0 0.0
    %246 = vmatpush1.msra.mxu0 %v120
    %247 = vmatprep.subr.mxu0 0.0
    %248 = vmatpush1.msra.mxu0 %v121
    %249 = vmatprep.subr.mxu0 0.0
    %250 = vmatpush1.msra.mxu0 %v122
    %251 = vmatprep.subr.mxu0 0.0
    %252 = vmatpush1.msra.mxu0 %v123
    %253 = vmatprep.subr.mxu0 0.0
    %254 = vmatpush1.msra.mxu0 %v124
    %255 = vmatprep.subr.mxu0 0.0
    %256 = vmatpush1.msra.mxu0 %v125
    %257 = vmatprep.subr.mxu0 0.0
    %258 = vmatpush1.msra.mxu0 %v126
    %259 = vmatprep.subr.mxu0 0.0
    %260 = vmatpush1.msra.mxu0 %v127
    %261 = vmatprep.subr.mxu0 0.0
    %262 = vmatpush1.msra.mxu0 %v128
    %263 = vmatprep.subr.mxu0 0.0
    %264 = vmatpush1.msra.mxu0 %v129
    %265 = vmatprep.subr.mxu0 0.0
    %266 = vmatpush1.msra.mxu0 %v130
    %267 = vmatprep.subr.mxu0 0.0
    %268 = vmatpush1.msra.mxu0 %v131
    %269 = vmatprep.subr.mxu0 0.0
    %270 = vmatpush1.msra.mxu0 %v132
    %271 = vmatprep.subr.mxu0 0.0
    %272 = vmatpush1.msra.mxu0 %v133
    %273 = vmatprep.subr.mxu0 0.0
    %274 = vmatpush1.msra.mxu0 %v134
    %275 = vmatprep.subr.mxu0 0.0
    %276 = vmatpush1.msra.mxu0 %v135
    %277 = vmatprep.subr.mxu0 0.0
    %278 = vmatpush1.msra.mxu0 %v136
    %279 = vmatprep.subr.mxu0 0.0
    %280 = vmatpush1.msra.mxu0 %v137
    %281 = vmatprep.subr.mxu0 0.0
    %282 = vmatpush1.msra.mxu0 %v138
    %283 = vmatprep.subr.mxu0 0.0
    %284 = vmatpush1.msra.mxu0 %v139
    %285 = vmatprep.subr.mxu0 0.0
    %286 = vmatpush1.msra.mxu0 %v140
    %287 = vmatprep.subr.mxu0 0.0
    %288 = vmatpush1.msra.mxu0 %v141
    %289 = vmatprep.mubr.f32.mxu0 %v48
    %290 = vmatmul.mubr.f32.gmra.mrb[0].mxu0 %v47
    %v291 = vpop.f32.mrb[0].mxu0
    %v292 = vadd.f32 %v222, %v291
    %v293 = vpop.f32.mrb[0].mxu0
    %294 = vdwg.mxu0
    %295 = vmatprep.subr.mxu0 0.0
    %296 = vmatpush1.msra.mxu0 %v142
    %297 = vmatprep.subr.mxu0 0.0
    %298 = vmatpush1.msra.mxu0 %v143
    %299 = vmatprep.subr.mxu0 0.0
    %300 = vmatpush1.msra.mxu0 %v144
    %301 = vmatprep.subr.mxu0 0.0
    %302 = vmatpush1.msra.mxu0 %v145
    %303 = vmatprep.subr.mxu0 0.0
    %304 = vmatpush1.msra.mxu0 %v146
    %305 = vmatprep.subr.mxu0 0.0
    %306 = vmatpush1.msra.mxu0 %v153
    %307 = vmatprep.subr.mxu0 0.0
    %308 = vmatpush1.msra.mxu0 0.0
    %309 = vmatprep.subr.mxu0 0.0
    %310 = vmatpush1.msra.mxu0 0.0
    %311 = vmatprep.subr.mxu0 0.0
    %312 = vmatpush1.msra.mxu0 0.0
    %313 = vmatprep.subr.mxu0 0.0
    %314 = vmatpush1.msra.mxu0 0.0
    %315 = vmatprep.subr.mxu0 0.0
    %316 = vmatpush1.msra.mxu0 0.0
    %317 = vmatprep.subr.mxu0 0.0
    %318 = vmatpush1.msra.mxu0 0.0
    %319 = vmatprep.subr.mxu0 0.0
    %320 = vmatpush1.msra.mxu0 0.0
    %321 = vmatprep.subr.mxu0 0.0
    %322 = vmatpush1.msra.mxu0 0.0
    %323 = vmatprep.subr.mxu0 0.0
    %324 = vmatpush1.msra.mxu0 0.0
    %325 = vmatprep.subr.mxu0 0.0
    %326 = vmatpush1.msra.mxu0 0.0
    %327 = vmatprep.subr.mxu0 0.0
    %328 = vmatpush1.msra.mxu0 0.0
    %329 = vmatprep.subr.mxu0 0.0
    %330 = vmatpush1.msra.mxu0 0.0
    %331 = vmatprep.subr.mxu0 0.0
    %332 = vmatpush1.msra.mxu0 0.0
    %333 = vmatprep.subr.mxu0 0.0
    %334 = vmatpush1.msra.mxu0 0.0
    %335 = vmatprep.subr.mxu0 0.0
    %336 = vmatpush1.msra.mxu0 0.0
    %337 = vmatprep.subr.mxu0 0.0
    %338 = vmatpush1.msra.mxu0 0.0
    %339 = vmatprep.subr.mxu0 0.0
    %340 = vmatpush1.msra.mxu0 0.0
    %341 = vmatprep.subr.mxu0 0.0
    %342 = vmatpush1.msra.mxu0 0.0
    %343 = vmatprep.subr.mxu0 0.0
    %344 = vmatpush1.msra.mxu0 0.0
    %345 = vmatprep.subr.mxu0 0.0
    %346 = vmatpush1.msra.mxu0 0.0
    %347 = vmatprep.subr.mxu0 0.0
    %348 = vmatpush1.msra.mxu0 0.0
    %349 = vmatprep.subr.mxu0 0.0
    %350 = vmatpush1.msra.mxu0 0.0
    %351 = vmatprep.subr.mxu0 0.0
    %352 = vmatpush1.msra.mxu0 0.0
    %353 = vmatprep.subr.mxu0 0.0
    %354 = vmatpush1.msra.mxu0 0.0
    %355 = vmatprep.subr.mxu0 0.0
    %356 = vmatpush1.msra.mxu0 0.0
    %357 = vmatprep.subr.mxu0 0.0
    %358 = vmatpush1.msra.mxu0 0.0
    %359 = vmatprep.mubr.f32.mxu0 0.0
    %360 = vmatmul.mubr.f32.gmra.mrb[0].mxu0 %v149
    %v361 = vpop.f32.mrb[0].mxu0
    %v362 = vadd.f32 %v292, %v361
    %v363 = vpop.f32.mrb[0].mxu0
    %364 = vdwg.mxu0
    %v365 = vld [vmem:[%s2] sm:$0x1]
    %v367 = vlaneseq
    %v368 = vshrl.u32 %v367, 7
    %v369 = vsub.s32 0, %v368
    %v370 = vrot.slane %v365, %v369
    %v372 = vmul.f32 %v59, %v370
    %v373 = vsub.f32 %v362, %v372
    %v374 = vmul.f32 %v373, %v77
    %v375 = vld [vmem:[%s3] sm:$0x1]
    %v377 = vlaneseq
    %v378 = vshrl.u32 %v377, 7
    %v379 = vsub.s32 0, %v378
    %v380 = vrot.slane %v375, %v379
    %v382 = vadd.f32 %v374, %v380
    %v383 = vmax.f32 %v382, 0.0
    %v384 = vld [vmem:[%s4] sm:$0xff]
    %v385 = vld [vmem:[%s4 + $0x8] sm:$0xff]
    %v386 = vld [vmem:[%s4 + $0x10] sm:$0xff]
    %v387 = vld [vmem:[%s4 + $0x18] sm:$0xff]
    %v388 = vld [vmem:[%s4 + $0x20] sm:$0xff]
    %v389 = vld [vmem:[%s4 + $0x28] sm:$0xff]
    %v390 = vld [vmem:[%s4 + $0x30] sm:$0xff]
    %v391 = vld [vmem:[%s4 + $0x38] sm:$0xff]
    %v392 = vld [vmem:[%s4 + $0x40] sm:$0xff]
    %v393 = vld [vmem:[%s4 + $0x48] sm:$0xff]
    %v394 = vld [vmem:[%s4 + $0x50] sm:$0xff]
    %v395 = vld [vmem:[%s4 + $0x58] sm:$0xff]
    %v396 = vld [vmem:[%s4 + $0x60] sm:$0xff]
    %v397 = vld [vmem:[%s4 + $0x68] sm:$0xff]
    %v398 = vld [vmem:[%s4 + $0x70] sm:$0xff]
    %v399 = vld [vmem:[%s4 + $0x78] sm:$0xff]
    %v400 = vld [vmem:[%s5] sm:$0x1]
    %v402 = vlaneseq
    %v403 = vshrl.u32 %v402, 7
    %v404 = vsub.s32 0, %v403
    %v405 = vrot.slane %v400, %v404
    %407 = vmatprep.subr.mxu0 0.0
    %408 = vmatpush1.msra.mxu0 %v384
    %409 = vmatprep.subr.mxu0 0.0
    %410 = vmatpush1.msra.mxu0 %v385
    %411 = vmatprep.subr.mxu0 0.0
    %412 = vmatpush1.msra.mxu0 %v386
    %413 = vmatprep.subr.mxu0 0.0
    %414 = vmatpush1.msra.mxu0 %v387
    %415 = vmatprep.subr.mxu0 0.0
    %416 = vmatpush1.msra.mxu0 %v388
    %417 = vmatprep.subr.mxu0 0.0
    %418 = vmatpush1.msra.mxu0 %v389
    %419 = vmatprep.subr.mxu0 0.0
    %420 = vmatpush1.msra.mxu0 %v390
    %421 = vmatprep.subr.mxu0 0.0
    %422 = vmatpush1.msra.mxu0 %v391
    %423 = vmatprep.subr.mxu0 0.0
    %424 = vmatpush1.msra.mxu0 %v392
    %425 = vmatprep.subr.mxu0 0.0
    %426 = vmatpush1.msra.mxu0 %v393
    %427 = vmatprep.subr.mxu0 0.0
    %428 = vmatpush1.msra.mxu0 %v394
    %429 = vmatprep.subr.mxu0 0.0
    %430 = vmatpush1.msra.mxu0 %v395
    %431 = vmatprep.subr.mxu0 0.0
    %432 = vmatpush1.msra.mxu0 %v396
    %433 = vmatprep.subr.mxu0 0.0
    %434 = vmatpush1.msra.mxu0 %v397
    %435 = vmatprep.subr.mxu0 0.0
    %436 = vmatpush1.msra.mxu0 %v398
    %437 = vmatprep.subr.mxu0 0.0
    %438 = vmatpush1.msra.mxu0 %v399
    %439 = vmatprep.subr.mxu0 0.0
    %440 = vmatpush1.msra.mxu0 0.0
    %441 = vmatprep.subr.mxu0 0.0
    %442 = vmatpush1.msra.mxu0 0.0
    %443 = vmatprep.subr.mxu0 0.0
    %444 = vmatpush1.msra.mxu0 0.0
    %445 = vmatprep.subr.mxu0 0.0
    %446 = vmatpush1.msra.mxu0 0.0
    %447 = vmatprep.subr.mxu0 0.0
    %448 = vmatpush1.msra.mxu0 0.0
    %449 = vmatprep.subr.mxu0 0.0
    %450 = vmatpush1.msra.mxu0 0.0
    %451 = vmatprep.subr.mxu0 0.0
    %452 = vmatpush1.msra.mxu0 0.0
    %453 = vmatprep.subr.mxu0 0.0
    %454 = vmatpush1.msra.mxu0 0.0
    %455 = vmatprep.subr.mxu0 0.0
    %456 = vmatpush1.msra.mxu0 0.0
    %457 = vmatprep.subr.mxu0 0.0
    %458 = vmatpush1.msra.mxu0 0.0
    %459 = vmatprep.subr.mxu0 0.0
    %460 = vmatpush1.msra.mxu0 0.0
    %461 = vmatprep.subr.mxu0 0.0
    %462 = vmatpush1.msra.mxu0 0.0
    %463 = vmatprep.subr.mxu0 0.0
    %464 = vmatpush1.msra.mxu0 0.0
    %465 = vmatprep.subr.mxu0 0.0
    %466 = vmatpush1.msra.mxu0 0.0
    %467 = vmatprep.subr.mxu0 0.0
    %468 = vmatpush1.msra.mxu0 0.0
    %469 = vmatprep.subr.mxu0 0.0
    %470 = vmatpush1.msra.mxu0 0.0
    %471 = vmatprep.mubr.f32.mxu0 0.0
    %472 = vmatmul.mubr.f32.gmra.mrb[0].mxu0 %v383
    %v473 = vpop.f32.mrb[0].mxu0
    %v474 = vadd.f32 %v405, %v473
    %v475 = vpop.f32.mrb[0].mxu0
    %476 = vdwg.mxu0
    %v477 = vmax.f32 %v474, 0.0
    %v478 = vld [vmem:[%s6] sm:$0x1]
    %v480 = vlaneseq
    %v481 = vshrl.u32 %v480, 7
    %v482 = vsub.s32 0, %v481
    %v483 = vrot.slane %v478, %v482
    %v485 = vmul.f32 %v477, %v483
    %vm486 = vcmask 523264
    %v487 = vsel %vm486, %v485, 0.0
    %488 = vadd.xlane.f32.xlu0 %v487
    %v489 = vpop.xlane.xlu0 %488
    %s490 = sld [smem:[#allocation2]]
    %v491 = vstv %s490
    %v492 = vadd.f32 %v489, %v491
    %v493 = vxor.u32 %v492, 2147483648
    %v494 = vmul.f32 %v493, 1.442695
    %v495 = vpow.pop %v494
    %v496 = vadd.f32 %v495, 1.0
    %v497 = vrcp.pop %v496
    %v498 = vmul.f32 1.0, %v497
    %v500 = vlaneseq
    %v501 = vand.u32 %v500, 127
    %v502 = vlaneseq
    %v503 = vshrl.u32 %v502, 7
    %v504 = vsub.s32 %v501, %v503
    %v505 = vrot.slane %v498, %v504
    %vm507 = vcmask 57344
    %508 = vst.msk [vmem:[#allocation6] sm:$0x1] %vm507, %v505
    // Predicated region
    $region38: #{tpu_custom_call.1} parent=1 // pred_check
      _
    $region39: #{tpu_custom_call.1} parent=1 // pred_check_branch
      %510 = sbr.rel (0) target = $region41
    $region40: #{tpu_custom_call.1} parent=1 // pred_region
      %s512 = ssub.s32 16, 16
      %513 = vsyncadd [#allocation5], %s512
      %s515 = sshll.u32 [#allocation6], 4
      %s516 = int_to_ptr.vmem [resolvable:$true] %s515
      %518 = dma.vmem_to_hbm [thread:$0]  %s516, 16, %s8, [#allocation5]
    $region41: #{tpu_custom_call.1} parent=1 // pred_fallthru
      _
    // Predicated region
    $region42: #{tpu_custom_call.1} parent=1 // pred_check
      _
    $region43: #{tpu_custom_call.1} parent=1 // pred_check_branch
      %520 = sbr.rel (0) target = $region45
    $region44: #{tpu_custom_call.1} parent=1 // pred_region
      %521 = dma.done [#allocation5], 16
    $region45: #{tpu_custom_call.1} parent=1 // pred_fallthru
      _
    %522 = vsyncpa [#allocation4], 1
    %523 = vsyncpa [#allocation5], 1

</llo_original>
